<compile_context>
chip_gen: v7x
topology: tpu7x:2x2x1
jax: 0.10.0
libtpu: 0.0.40
codegen_flags: <defaults>
</compile_context>

<pallas_src>
import functools

import jax
import jax.numpy as jnp
from jax.experimental import pallas as pl
from jax.experimental.pallas import tpu as pltpu


def _round_up(x, m):
    return ((x + m - 1) // m) * m


def _ffn_kernel(x_ref, w1_ref, b1_ref, w2_ref, b2_ref, g_ref, beta_ref, o_ref, *, eps):
    # x_ref: (tm, H) token tile (f32); w1/w2 resident in VMEM as bf16.
    x_f32 = x_ref[...].astype(jnp.float32)

    # fc1: bf16 @ bf16 on the MXU, f32 accumulation.
    h = jnp.dot(x_f32.astype(jnp.bfloat16), w1_ref[...],
                preferred_element_type=jnp.float32)
    h = h + b1_ref[...]
    h = jnp.maximum(h, 0.0)                      # ReLU

    # fc2: bf16 @ bf16, f32 accumulation.
    y = jnp.dot(h.astype(jnp.bfloat16), w2_ref[...],
                preferred_element_type=jnp.float32)
    y = y + b2_ref[...]

    # dropout = identity (eval mode); residual add in f32.
    y = y + x_f32

    # LayerNorm over the hidden axis (f32, PyTorch default eps=1e-5).
    mean = jnp.mean(y, axis=-1, keepdims=True)
    centered = y - mean
    var = jnp.mean(centered * centered, axis=-1, keepdims=True)
    normed = centered * jax.lax.rsqrt(var + eps)
    out = normed * g_ref[...] + beta_ref[...]

    o_ref[...] = out.astype(o_ref.dtype)


def _build_ffn_call(N, H, H4, tm, out_dtype, eps, single_buffer_weights):
    """Build the pallas_call for a padded token count N (divisible by tm)."""
    grid = (N // tm,)

    def const_spec(shape):
        # Grid-invariant block: single-buffer it to avoid 2x VMEM on the weights.
        if single_buffer_weights:
            return pl.BlockSpec(shape, lambda i: (0, 0), pipeline_mode=pl.Buffered(1))
        return pl.BlockSpec(shape, lambda i: (0, 0))

    # VMEM budget: bf16 weights (single copy) + f32 x/out tiles (double-buffered)
    # + the (tm, 4H) f32 intermediate, plus headroom.
    weight_bytes = 2 * (H * H4 + H4 * H)          # bf16 weights
    io_bytes = 2 * 2 * tm * H * 4                 # x + out tiles, double-buffered, f32
    interm_bytes = 2 * tm * H4 * 4                # fc1 activation (+ slack)
    vmem_limit = int(min(64 << 20,
                         weight_bytes + io_bytes + interm_bytes + (8 << 20)))

    return pl.pallas_call(
        functools.partial(_ffn_kernel, eps=eps),
        out_shape=jax.ShapeDtypeStruct((N, H), out_dtype),
        grid_spec=pltpu.PrefetchScalarGridSpec(
            num_scalar_prefetch=0,
            grid=grid,
            in_specs=[
                pl.BlockSpec((tm, H), lambda i: (i, 0)),   # x tile (streamed)
                const_spec((H, H4)),                       # w1 (bf16, resident)
                const_spec((1, H4)),                       # b1
                const_spec((H4, H)),                       # w2 (bf16, resident)
                const_spec((1, H)),                        # b2
                const_spec((1, H)),                        # gamma
                const_spec((1, H)),                        # beta
            ],
            out_specs=pl.BlockSpec((tm, H), lambda i: (i, 0)),
        ),
        compiler_params=pltpu.CompilerParams(
            dimension_semantics=("parallel",),
            vmem_limit_bytes=vmem_limit,
        ),
    )


def intermediate_forward(x, w1, b1, w2, b2, gamma, beta, *, eps=1e-5, tm=None):
    """x: (N, H) f32.  w1: (H, 4H), b1: (1, 4H), w2: (4H, H), b2/gamma/beta: (1, H)."""
    N, H = x.shape
    H4 = w1.shape[1]

    # Token tile: fill the MXU (256 on v6e/v7x; sweep 128 on v5e) but keep a few
    # grid steps in flight when the token count allows (pipelining / megacore).
    if tm is None:
        tm = 256
    tm = max(8, _round_up(min(tm, N), 8))
    while tm > 128 and pl.cdiv(N, tm) < 4:
        tm //= 2
    tm = _round_up(tm, 8)

    # Pad the token axis so the grid is exact; extra rows are sliced off below.
    Np = _round_up(N, tm)
    x_p = x if Np == N else jnp.pad(x, ((0, Np - N), (0, 0)))

    # Feed the MXU bf16 weights; accumulation stays f32 inside the kernel.
    w1_b = w1.astype(jnp.bfloat16)
    w2_b = w2.astype(jnp.bfloat16)
    b1_f = b1.astype(jnp.float32)
    b2_f = b2.astype(jnp.float32)
    g_f = gamma.astype(jnp.float32)
    beta_f = beta.astype(jnp.float32)

    args = (x_p, w1_b, b1_f, w2_b, b2_f, g_f, beta_f)
    try:
        out = _build_ffn_call(Np, H, H4, tm, x.dtype, eps, True)(*args)
    except Exception:
        # Fallback if single-buffered pipeline_mode is unsupported on this build.
        out = _build_ffn_call(Np, H, H4, tm, x.dtype, eps, False)(*args)

    return out if Np == N else out[:N]


def _reference(x, w1, b1, w2, b2, gamma, beta, eps=1e-5):
    h = jnp.maximum(x @ w1 + b1, 0.0)
    y = h @ w2 + b2 + x
    mean = jnp.mean(y, axis=-1, keepdims=True)
    var = jnp.mean((y - mean) ** 2, axis=-1, keepdims=True)
    return (y - mean) * jax.lax.rsqrt(var + eps) * gamma + beta


if __name__ == "__main__":
    # Small shapes implied by the module: (batch, seq, hid_dim) with hid_dim=32.
    batch, seq, hid = 2, 8, 32
    key = jax.random.PRNGKey(0)
    kx, k1, k2, k3, k4 = jax.random.split(key, 5)

    x3d = jax.random.normal(kx, (batch, seq, hid), dtype=jnp.float32)

    # Deterministic parameter init (fc weights stored already transposed to (in, out)).
    w1 = jax.random.normal(k1, (hid, 4 * hid), dtype=jnp.float32) * 0.05
    b1 = jax.random.normal(k2, (1, 4 * hid), dtype=jnp.float32) * 0.01
    w2 = jax.random.normal(k3, (4 * hid, hid), dtype=jnp.float32) * 0.05
    b2 = jax.random.normal(k4, (1, hid), dtype=jnp.float32) * 0.01
    gamma = jnp.ones((1, hid), dtype=jnp.float32)
    beta = jnp.zeros((1, hid), dtype=jnp.float32)

    # Flatten (batch, seq, hid) -> (N, hid) for the kernel, reshape back after.
    x2d = x3d.reshape(batch * seq, hid)
    out2d = intermediate_forward(x2d, w1, b1, w2, b2, gamma, beta)
    out = out2d.reshape(batch, seq, hid)
    jax.block_until_ready(out)

    # Sanity check vs pure-JAX f32 reference (kernel uses bf16 weight inputs,
    # f32 accumulation -> looser tolerance than a pure-f32 path).
    ref = _reference(x2d, w1, b1, w2, b2, gamma, beta).reshape(batch, seq, hid)
    assert jnp.allclose(out, ref, atol=2e-2, rtol=2e-2), "mismatch vs reference"

    print("KERNEL_OK")
</pallas_src>

<mosaic_0001>
module attributes {stable_mosaic.version = 11 : i64} {
  func.func @_ffn_kernel(%arg0: i32, %arg1: memref<16x32xf32, #tpu.memory_space<vmem>>, %arg2: memref<32x128xbf16, #tpu.memory_space<vmem>>, %arg3: memref<1x128xf32, #tpu.memory_space<vmem>>, %arg4: memref<128x32xbf16, #tpu.memory_space<vmem>>, %arg5: memref<1x32xf32, #tpu.memory_space<vmem>>, %arg6: memref<1x32xf32, #tpu.memory_space<vmem>>, %arg7: memref<1x32xf32, #tpu.memory_space<vmem>>, %arg8: memref<16x32xf32, #tpu.memory_space<vmem>>) attributes {dimension_semantics = [#tpu.dimension_semantics<parallel>], iteration_bounds = array<i64: 1>, scalar_prefetch = 0 : i64, scratch_operands = 0 : i64, tpu.core_type = #tpu.core_type<tc>, window_params = [{transform_indices = @transform_0, window_bounds = array<i64: 16, 32>}, {pipeline_mode = #tpu.pipeline_mode<synchronous>, transform_indices = @transform_1, window_bounds = array<i64: 32, 128>}, {pipeline_mode = #tpu.pipeline_mode<synchronous>, transform_indices = @transform_2, window_bounds = array<i64: 1, 128>}, {pipeline_mode = #tpu.pipeline_mode<synchronous>, transform_indices = @transform_3, window_bounds = array<i64: 128, 32>}, {pipeline_mode = #tpu.pipeline_mode<synchronous>, transform_indices = @transform_4, window_bounds = array<i64: 1, 32>}, {pipeline_mode = #tpu.pipeline_mode<synchronous>, transform_indices = @transform_5, window_bounds = array<i64: 1, 32>}, {pipeline_mode = #tpu.pipeline_mode<synchronous>, transform_indices = @transform_6, window_bounds = array<i64: 1, 32>}, {transform_indices = @transform_7, window_bounds = array<i64: 16, 32>}]} {
    %c0 = arith.constant 0 : index
    %c0_0 = arith.constant 0 : index
    %0 = vector.load %arg1[%c0, %c0_0] : memref<16x32xf32, #tpu.memory_space<vmem>>, vector<16x32xf32>
    %1 = arith.truncf %0 : vector<16x32xf32> to vector<16x32xbf16>
    %c0_1 = arith.constant 0 : index
    %c0_2 = arith.constant 0 : index
    %2 = vector.load %arg2[%c0_1, %c0_2] : memref<32x128xbf16, #tpu.memory_space<vmem>>, vector<32x128xbf16>
    %cst = arith.constant dense<0.000000e+00> : vector<16x128xf32>
    %3 = tpu.matmul %1, %2, %cst {dimension_numbers = #tpu.dot_dimension_numbers<[1], [0], [0], [1], [0, 0, 1, 1], [], []>} : vector<16x32xbf16>, vector<32x128xbf16>, vector<16x128xf32> -> vector<16x128xf32>
    %c0_3 = arith.constant 0 : index
    %c0_4 = arith.constant 0 : index
    %4 = vector.load %arg3[%c0_3, %c0_4] : memref<1x128xf32, #tpu.memory_space<vmem>>, vector<1x128xf32>
    %5 = vector.broadcast %4 : vector<1x128xf32> to vector<16x128xf32>
    %6 = arith.addf %3, %5 : vector<16x128xf32>
    %cst_5 = arith.constant 0.000000e+00 : f32
    %7 = vector.broadcast %cst_5 : f32 to vector<16x128xf32>
    %8 = arith.maximumf %6, %7 : vector<16x128xf32>
    %9 = arith.truncf %8 : vector<16x128xf32> to vector<16x128xbf16>
    %c0_6 = arith.constant 0 : index
    %c0_7 = arith.constant 0 : index
    %10 = vector.load %arg4[%c0_6, %c0_7] : memref<128x32xbf16, #tpu.memory_space<vmem>>, vector<128x32xbf16>
    %cst_8 = arith.constant dense<0.000000e+00> : vector<16x32xf32>
    %11 = tpu.matmul %9, %10, %cst_8 {dimension_numbers = #tpu.dot_dimension_numbers<[1], [0], [0], [1], [0, 0, 1, 1], [], []>} : vector<16x128xbf16>, vector<128x32xbf16>, vector<16x32xf32> -> vector<16x32xf32>
    %c0_9 = arith.constant 0 : index
    %c0_10 = arith.constant 0 : index
    %12 = vector.load %arg5[%c0_9, %c0_10] : memref<1x32xf32, #tpu.memory_space<vmem>>, vector<1x32xf32>
    %13 = vector.broadcast %12 : vector<1x32xf32> to vector<16x32xf32>
    %14 = arith.addf %11, %13 : vector<16x32xf32>
    %15 = arith.addf %14, %0 : vector<16x32xf32>
    %cst_11 = arith.constant dense<0.000000e+00> : vector<16xf32>
    %16 = vector.multi_reduction <add>, %15, %cst_11 [1] : vector<16x32xf32> to vector<16xf32>
    %17 = vector.shape_cast %16 : vector<16xf32> to vector<16x1xf32>
    %cst_12 = arith.constant 3.200000e+01 : f32
    %18 = vector.broadcast %cst_12 : f32 to vector<16x1xf32>
    %19 = arith.divf %17, %18 : vector<16x1xf32>
    %20 = vector.broadcast %19 : vector<16x1xf32> to vector<16x32xf32>
    %21 = arith.subf %15, %20 : vector<16x32xf32>
    %22 = arith.mulf %21, %21 : vector<16x32xf32>
    %cst_13 = arith.constant dense<0.000000e+00> : vector<16xf32>
    %23 = vector.multi_reduction <add>, %22, %cst_13 [1] : vector<16x32xf32> to vector<16xf32>
    %24 = vector.shape_cast %23 : vector<16xf32> to vector<16x1xf32>
    %cst_14 = arith.constant 3.200000e+01 : f32
    %25 = vector.broadcast %cst_14 : f32 to vector<16x1xf32>
    %26 = arith.divf %24, %25 : vector<16x1xf32>
    %cst_15 = arith.constant 9.99999974E-6 : f32
    %27 = vector.broadcast %cst_15 : f32 to vector<16x1xf32>
    %28 = arith.addf %26, %27 : vector<16x1xf32>
    %29 = math.rsqrt %28 : vector<16x1xf32>
    %30 = vector.broadcast %29 : vector<16x1xf32> to vector<16x32xf32>
    %31 = arith.mulf %21, %30 : vector<16x32xf32>
    %c0_16 = arith.constant 0 : index
    %c0_17 = arith.constant 0 : index
    %32 = vector.load %arg6[%c0_16, %c0_17] : memref<1x32xf32, #tpu.memory_space<vmem>>, vector<1x32xf32>
    %33 = vector.broadcast %32 : vector<1x32xf32> to vector<16x32xf32>
    %34 = arith.mulf %31, %33 : vector<16x32xf32>
    %c0_18 = arith.constant 0 : index
    %c0_19 = arith.constant 0 : index
    %35 = vector.load %arg7[%c0_18, %c0_19] : memref<1x32xf32, #tpu.memory_space<vmem>>, vector<1x32xf32>
    %36 = vector.broadcast %35 : vector<1x32xf32> to vector<16x32xf32>
    %37 = arith.addf %34, %36 : vector<16x32xf32>
    %c0_20 = arith.constant 0 : index
    %c0_21 = arith.constant 0 : index
    %38 = vector.load %arg8[%c0_20, %c0_21] : memref<16x32xf32, #tpu.memory_space<vmem>>, vector<16x32xf32>
    tpu.vector_store %arg8[%c0_20, %c0_21], %37 {strides = array<i32>} : memref<16x32xf32, #tpu.memory_space<vmem>>, vector<16x32xf32>,
    return
  }
  func.func @transform_0(%arg0: i32) -> (i32, i32) {
    %c0_i32 = arith.constant 0 : i32
    %c0_i32_0 = arith.constant 0 : i32
    return %arg0, %c0_i32 : i32, i32
  }
  func.func @transform_1(%arg0: i32) -> (i32, i32) {
    %c0_i32 = arith.constant 0 : i32
    %c0_i32_0 = arith.constant 0 : i32
    %c0_i32_1 = arith.constant 0 : i32
    return %c0_i32, %c0_i32_0 : i32, i32
  }
  func.func @transform_2(%arg0: i32) -> (i32, i32) {
    %c0_i32 = arith.constant 0 : i32
    %c0_i32_0 = arith.constant 0 : i32
    %c0_i32_1 = arith.constant 0 : i32
    return %c0_i32, %c0_i32_0 : i32, i32
  }
  func.func @transform_3(%arg0: i32) -> (i32, i32) {
    %c0_i32 = arith.constant 0 : i32
    %c0_i32_0 = arith.constant 0 : i32
    %c0_i32_1 = arith.constant 0 : i32
    return %c0_i32, %c0_i32_0 : i32, i32
  }
  func.func @transform_4(%arg0: i32) -> (i32, i32) {
    %c0_i32 = arith.constant 0 : i32
    %c0_i32_0 = arith.constant 0 : i32
    %c0_i32_1 = arith.constant 0 : i32
    return %c0_i32, %c0_i32_0 : i32, i32
  }
  func.func @transform_5(%arg0: i32) -> (i32, i32) {
    %c0_i32 = arith.constant 0 : i32
    %c0_i32_0 = arith.constant 0 : i32
    %c0_i32_1 = arith.constant 0 : i32
    return %c0_i32, %c0_i32_0 : i32, i32
  }
  func.func @transform_6(%arg0: i32) -> (i32, i32) {
    %c0_i32 = arith.constant 0 : i32
    %c0_i32_0 = arith.constant 0 : i32
    %c0_i32_1 = arith.constant 0 : i32
    return %c0_i32, %c0_i32_0 : i32, i32
  }
  func.func @transform_7(%arg0: i32) -> (i32, i32) {
    %c0_i32 = arith.constant 0 : i32
    %c0_i32_0 = arith.constant 0 : i32
    return %arg0, %c0_i32 : i32, i32
  }
}

module attributes {stable_mosaic.version = 11 : i64} {
  func.func @_ffn_kernel(%arg0: i32, %arg1: memref<16x32xf32, #tpu.memory_space<vmem>>, %arg2: memref<32x128xbf16, #tpu.memory_space<vmem>>, %arg3: memref<1x128xf32, #tpu.memory_space<vmem>>, %arg4: memref<128x32xbf16, #tpu.memory_space<vmem>>, %arg5: memref<1x32xf32, #tpu.memory_space<vmem>>, %arg6: memref<1x32xf32, #tpu.memory_space<vmem>>, %arg7: memref<1x32xf32, #tpu.memory_space<vmem>>, %arg8: memref<16x32xf32, #tpu.memory_space<vmem>>) attributes {dimension_semantics = [#tpu.dimension_semantics<parallel>], iteration_bounds = array<i64: 1>, scalar_prefetch = 0 : i64, scratch_operands = 0 : i64, tpu.core_type = #tpu.core_type<tc>, window_params = [{transform_indices = @transform_0, window_bounds = array<i64: 16, 32>}, {pipeline_mode = #tpu.pipeline_mode<synchronous>, transform_indices = @transform_1, window_bounds = array<i64: 32, 128>}, {pipeline_mode = #tpu.pipeline_mode<synchronous>, transform_indices = @transform_2, window_bounds = array<i64: 1, 128>}, {pipeline_mode = #tpu.pipeline_mode<synchronous>, transform_indices = @transform_3, window_bounds = array<i64: 128, 32>}, {pipeline_mode = #tpu.pipeline_mode<synchronous>, transform_indices = @transform_4, window_bounds = array<i64: 1, 32>}, {pipeline_mode = #tpu.pipeline_mode<synchronous>, transform_indices = @transform_5, window_bounds = array<i64: 1, 32>}, {pipeline_mode = #tpu.pipeline_mode<synchronous>, transform_indices = @transform_6, window_bounds = array<i64: 1, 32>}, {transform_indices = @transform_7, window_bounds = array<i64: 16, 32>}]} {
    %c0 = arith.constant 0 : index
    %c0_0 = arith.constant 0 : index
    %0 = vector.load %arg1[%c0, %c0_0] : memref<16x32xf32, #tpu.memory_space<vmem>>, vector<16x32xf32>
    %1 = arith.truncf %0 : vector<16x32xf32> to vector<16x32xbf16>
    %c0_1 = arith.constant 0 : index
    %c0_2 = arith.constant 0 : index
    %2 = vector.load %arg2[%c0_1, %c0_2] : memref<32x128xbf16, #tpu.memory_space<vmem>>, vector<32x128xbf16>
    %cst = arith.constant dense<0.000000e+00> : vector<16x128xf32>
    %3 = tpu.matmul %1, %2, %cst {dimension_numbers = #tpu.dot_dimension_numbers<[1], [0], [0], [1], [0, 0, 1, 1], [], []>} : vector<16x32xbf16>, vector<32x128xbf16>, vector<16x128xf32> -> vector<16x128xf32>
    %c0_3 = arith.constant 0 : index
    %c0_4 = arith.constant 0 : index
    %4 = vector.load %arg3[%c0_3, %c0_4] : memref<1x128xf32, #tpu.memory_space<vmem>>, vector<1x128xf32>
    %5 = vector.broadcast %4 : vector<1x128xf32> to vector<16x128xf32>
    %6 = arith.addf %3, %5 : vector<16x128xf32>
    %cst_5 = arith.constant 0.000000e+00 : f32
    %7 = vector.broadcast %cst_5 : f32 to vector<16x128xf32>
    %8 = arith.maximumf %6, %7 : vector<16x128xf32>
    %9 = arith.truncf %8 : vector<16x128xf32> to vector<16x128xbf16>
    %c0_6 = arith.constant 0 : index
    %c0_7 = arith.constant 0 : index
    %10 = vector.load %arg4[%c0_6, %c0_7] : memref<128x32xbf16, #tpu.memory_space<vmem>>, vector<128x32xbf16>
    %cst_8 = arith.constant dense<0.000000e+00> : vector<16x32xf32>
    %11 = tpu.matmul %9, %10, %cst_8 {dimension_numbers = #tpu.dot_dimension_numbers<[1], [0], [0], [1], [0, 0, 1, 1], [], []>} : vector<16x128xbf16>, vector<128x32xbf16>, vector<16x32xf32> -> vector<16x32xf32>
    %c0_9 = arith.constant 0 : index
    %c0_10 = arith.constant 0 : index
    %12 = vector.load %arg5[%c0_9, %c0_10] : memref<1x32xf32, #tpu.memory_space<vmem>>, vector<1x32xf32>
    %13 = vector.broadcast %12 : vector<1x32xf32> to vector<16x32xf32>
    %14 = arith.addf %11, %13 : vector<16x32xf32>
    %15 = arith.addf %14, %0 : vector<16x32xf32>
    %cst_11 = arith.constant dense<0.000000e+00> : vector<16xf32>
    %16 = vector.multi_reduction <add>, %15, %cst_11 [1] : vector<16x32xf32> to vector<16xf32>
    %17 = vector.shape_cast %16 : vector<16xf32> to vector<16x1xf32>
    %cst_12 = arith.constant 3.200000e+01 : f32
    %18 = vector.broadcast %cst_12 : f32 to vector<16x1xf32>
    %19 = arith.divf %17, %18 : vector<16x1xf32>
    %20 = vector.broadcast %19 : vector<16x1xf32> to vector<16x32xf32>
    %21 = arith.subf %15, %20 : vector<16x32xf32>
    %22 = arith.mulf %21, %21 : vector<16x32xf32>
    %cst_13 = arith.constant dense<0.000000e+00> : vector<16xf32>
    %23 = vector.multi_reduction <add>, %22, %cst_13 [1] : vector<16x32xf32> to vector<16xf32>
    %24 = vector.shape_cast %23 : vector<16xf32> to vector<16x1xf32>
    %cst_14 = arith.constant 3.200000e+01 : f32
    %25 = vector.broadcast %cst_14 : f32 to vector<16x1xf32>
    %26 = arith.divf %24, %25 : vector<16x1xf32>
    %cst_15 = arith.constant 9.99999974E-6 : f32
    %27 = vector.broadcast %cst_15 : f32 to vector<16x1xf32>
    %28 = arith.addf %26, %27 : vector<16x1xf32>
    %29 = math.rsqrt %28 : vector<16x1xf32>
    %30 = vector.broadcast %29 : vector<16x1xf32> to vector<16x32xf32>
    %31 = arith.mulf %21, %30 : vector<16x32xf32>
    %c0_16 = arith.constant 0 : index
    %c0_17 = arith.constant 0 : index
    %32 = vector.load %arg6[%c0_16, %c0_17] : memref<1x32xf32, #tpu.memory_space<vmem>>, vector<1x32xf32>
    %33 = vector.broadcast %32 : vector<1x32xf32> to vector<16x32xf32>
    %34 = arith.mulf %31, %33 : vector<16x32xf32>
    %c0_18 = arith.constant 0 : index
    %c0_19 = arith.constant 0 : index
    %35 = vector.load %arg7[%c0_18, %c0_19] : memref<1x32xf32, #tpu.memory_space<vmem>>, vector<1x32xf32>
    %36 = vector.broadcast %35 : vector<1x32xf32> to vector<16x32xf32>
    %37 = arith.addf %34, %36 : vector<16x32xf32>
    %c0_20 = arith.constant 0 : index
    %c0_21 = arith.constant 0 : index
    %38 = vector.load %arg8[%c0_20, %c0_21] : memref<16x32xf32, #tpu.memory_space<vmem>>, vector<16x32xf32>
    tpu.vector_store %arg8[%c0_20, %c0_21], %37 {strides = array<i32>} : memref<16x32xf32, #tpu.memory_space<vmem>>, vector<16x32xf32>,
    return
  }
  func.func @transform_0(%arg0: i32) -> (i32, i32) {
    %c0_i32 = arith.constant 0 : i32
    %c0_i32_0 = arith.constant 0 : i32
    return %arg0, %c0_i32 : i32, i32
  }
  func.func @transform_1(%arg0: i32) -> (i32, i32) {
    %c0_i32 = arith.constant 0 : i32
    %c0_i32_0 = arith.constant 0 : i32
    %c0_i32_1 = arith.constant 0 : i32
    return %c0_i32, %c0_i32_0 : i32, i32
  }
  func.func @transform_2(%arg0: i32) -> (i32, i32) {
    %c0_i32 = arith.constant 0 : i32
    %c0_i32_0 = arith.constant 0 : i32
    %c0_i32_1 = arith.constant 0 : i32
    return %c0_i32, %c0_i32_0 : i32, i32
  }
  func.func @transform_3(%arg0: i32) -> (i32, i32) {
    %c0_i32 = arith.constant 0 : i32
    %c0_i32_0 = arith.constant 0 : i32
    %c0_i32_1 = arith.constant 0 : i32
    return %c0_i32, %c0_i32_0 : i32, i32
  }
  func.func @transform_4(%arg0: i32) -> (i32, i32) {
    %c0_i32 = arith.constant 0 : i32
    %c0_i32_0 = arith.constant 0 : i32
    %c0_i32_1 = arith.constant 0 : i32
    return %c0_i32, %c0_i32_0 : i32, i32
  }
  func.func @transform_5(%arg0: i32) -> (i32, i32) {
    %c0_i32 = arith.constant 0 : i32
    %c0_i32_0 = arith.constant 0 : i32
    %c0_i32_1 = arith.constant 0 : i32
    return %c0_i32, %c0_i32_0 : i32, i32
  }
  func.func @transform_6(%arg0: i32) -> (i32, i32) {
    %c0_i32 = arith.constant 0 : i32
    %c0_i32_0 = arith.constant 0 : i32
    %c0_i32_1 = arith.constant 0 : i32
    return %c0_i32, %c0_i32_0 : i32, i32
  }
  func.func @transform_7(%arg0: i32) -> (i32, i32) {
    %c0_i32 = arith.constant 0 : i32
    %c0_i32_0 = arith.constant 0 : i32
    return %arg0, %c0_i32 : i32, i32
  }
}

</mosaic_0001>

<llo_original>
// kernel: tpu_custom_call.1
$region0: #{tpu_custom_call.1}
  #allocation0 [shape = 'u32[]', space=smem, size = 0x4, offset = 0x4, fixed_abs, tag = 'smem constant byte address 0x4 - core index']
  #allocation1 [shape = 'u32[144,128]{1,0:T(1,128)}', space=vmem, size = 0x12000, scoped, tag = 'internal scratch']
  %s0 = inlined_call_operand.vmem [shape: f32[16,32], index: 0, kind: input, shape index: {}]
  %s1 = inlined_call_operand.vmem [shape: bf16[32,128], index: 1, kind: input, shape index: {}]
  %s2 = inlined_call_operand.vmem [shape: f32[1,128], index: 2, kind: input, shape index: {}]
  %s3 = inlined_call_operand.vmem [shape: bf16[128,32], index: 3, kind: input, shape index: {}]
  %s4 = inlined_call_operand.vmem [shape: f32[1,32], index: 4, kind: input, shape index: {}]
  %s5 = inlined_call_operand.vmem [shape: f32[1,32], index: 5, kind: input, shape index: {}]
  %s6 = inlined_call_operand.vmem [shape: f32[1,32], index: 6, kind: input, shape index: {}]
  %s7 = inlined_call_operand.hbm [shape: f32[16,32], index: 7, kind: output, shape index: {}]
  %s8 = sld [smem:[#allocation0]]
  $region38: #{tpu_custom_call.1} parent=0
    _
  %s10 = ssub.s32 1, %s8
  %s11 = scalar_select 0, %s10, %s8
  $region1: #{tpu_custom_call.1} parent=0
    #allocation2 [shape = 'u8[8192]{0}', space=vmem, size = 0x2000, scoped, tag = 'output window, operand 0, single buffered']
    #allocation3 [shape = 's32[1]{0}', space=sflag, size = 0x4, scoped, tag = 'scoped memory for tpu_custom_call.1']
    %12 = vsyncpa [#allocation3], 0
    // Predicated region
    $region2: #{tpu_custom_call.1} parent=1 // pred_check
      _
    $region3: #{tpu_custom_call.1} parent=1 // pred_check_branch
      %14 = sbr.rel (0) target = $region5
    $region4: #{tpu_custom_call.1} parent=1 // pred_region
      _
    $region5: #{tpu_custom_call.1} parent=1 // pred_fallthru
      _
    // Predicated region
    $region6: #{tpu_custom_call.1} parent=1 // pred_check
      _
    $region7: #{tpu_custom_call.1} parent=1 // pred_check_branch
      %16 = sbr.rel (0) target = $region9
    $region8: #{tpu_custom_call.1} parent=1 // pred_region
      _
    $region9: #{tpu_custom_call.1} parent=1 // pred_fallthru
      _
    // Predicated region
    $region10: #{tpu_custom_call.1} parent=1 // pred_check
      _
    $region11: #{tpu_custom_call.1} parent=1 // pred_check_branch
      %18 = sbr.rel (0) target = $region13
    $region12: #{tpu_custom_call.1} parent=1 // pred_region
      _
    $region13: #{tpu_custom_call.1} parent=1 // pred_fallthru
      _
    // Predicated region
    $region14: #{tpu_custom_call.1} parent=1 // pred_check
      _
    $region15: #{tpu_custom_call.1} parent=1 // pred_check_branch
      %20 = sbr.rel (0) target = $region17
    $region16: #{tpu_custom_call.1} parent=1 // pred_region
      _
    $region17: #{tpu_custom_call.1} parent=1 // pred_fallthru
      _
    // Predicated region
    $region18: #{tpu_custom_call.1} parent=1 // pred_check
      _
    $region19: #{tpu_custom_call.1} parent=1 // pred_check_branch
      %22 = sbr.rel (0) target = $region21
    $region20: #{tpu_custom_call.1} parent=1 // pred_region
      _
    $region21: #{tpu_custom_call.1} parent=1 // pred_fallthru
      _
    // Predicated region
    $region22: #{tpu_custom_call.1} parent=1 // pred_check
      _
    $region23: #{tpu_custom_call.1} parent=1 // pred_check_branch
      %24 = sbr.rel (0) target = $region25
    $region24: #{tpu_custom_call.1} parent=1 // pred_region
      _
    $region25: #{tpu_custom_call.1} parent=1 // pred_fallthru
      _
    // Predicated region
    $region26: #{tpu_custom_call.1} parent=1 // pred_check
      _
    $region27: #{tpu_custom_call.1} parent=1 // pred_check_branch
      %26 = sbr.rel (0) target = $region29
    $region28: #{tpu_custom_call.1} parent=1 // pred_region
      _
    $region29: #{tpu_custom_call.1} parent=1 // pred_fallthru
      _
    %v28 = vld [vmem:[%s0] sm:$0xff]
    %v29 = vld [vmem:[%s0 + $0x8] sm:$0xff]
    %v30 = vpack.c.bf16 %v29, %v28
    %v31 = vld [vmem:[%s1] sm:$0xf]
    %v32 = vld [vmem:[%s1 + $0x4] sm:$0xf]
    %v33 = vld [vmem:[%s1 + $0x8] sm:$0xf]
    %v34 = vld [vmem:[%s1 + $0xc] sm:$0xf]
    %v35 = vld [vmem:[%s2] sm:$0x1]
    %v37 = vlaneseq
    %v38 = vshrl.u32 %v37, 7
    %v39 = vsub.s32 0, %v38
    %v40 = vrot.slane %v35, %v39
    %v46 = vunpack.c.l.b16 %v31
    %v47 = vunpack.c.l.b16 %v32
    %v48 = vunpack.c.l.b16 %v33
    %v49 = vunpack.c.l.b16 %v34
    %v50 = vpack.c.b16 %v47, %v46
    %v51 = vpack.c.b16 %v49, %v48
    %vm54 = vcmask 261120
    %v56 = vsel %vm54, %v30, 0
    %58 = vmatprep.subr.bf16.mxu0 0
    %59 = vmatpush1.bf16.msra.mxu0 %v50
    %60 = vmatprep.subr.bf16.mxu0 0
    %61 = vmatpush1.bf16.msra.mxu0 %v51
    %62 = vmatprep.subr.bf16.mxu0 0
    %63 = vmatpush1.bf16.msra.mxu0 0
    %64 = vmatprep.subr.bf16.mxu0 0
    %65 = vmatpush1.bf16.msra.mxu0 0
    %66 = vmatprep.subr.bf16.mxu0 0
    %67 = vmatpush1.bf16.msra.mxu0 0
    %68 = vmatprep.subr.bf16.mxu0 0
    %69 = vmatpush1.bf16.msra.mxu0 0
    %70 = vmatprep.subr.bf16.mxu0 0
    %71 = vmatpush1.bf16.msra.mxu0 0
    %72 = vmatprep.subr.bf16.mxu0 0
    %73 = vmatpush1.bf16.msra.mxu0 0
    %74 = vmatprep.subr.bf16.mxu0 0
    %75 = vmatpush1.bf16.msra.mxu0 0
    %76 = vmatprep.subr.bf16.mxu0 0
    %77 = vmatpush1.bf16.msra.mxu0 0
    %78 = vmatprep.subr.bf16.mxu0 0
    %79 = vmatpush1.bf16.msra.mxu0 0
    %80 = vmatprep.subr.bf16.mxu0 0
    %81 = vmatpush1.bf16.msra.mxu0 0
    %82 = vmatprep.subr.bf16.mxu0 0
    %83 = vmatpush1.bf16.msra.mxu0 0
    %84 = vmatprep.subr.bf16.mxu0 0
    %85 = vmatpush1.bf16.msra.mxu0 0
    %86 = vmatprep.subr.bf16.mxu0 0
    %87 = vmatpush1.bf16.msra.mxu0 0
    %88 = vmatprep.subr.bf16.mxu0 0
    %89 = vmatpush1.bf16.msra.mxu0 0
    %90 = vmatprep.mubr.bf16.mxu0 0
    %91 = vmatmul.mubr.bf16.gmra.mrb[0].mxu0 %v56
    %v92 = vpop.f32.mrb[0].mxu0
    %v93 = vadd.f32 %v40, %v92
    %v94 = vpop.f32.mrb[0].mxu0
    %v95 = vpop.f32.mrb[0].mxu0
    %v96 = vadd.f32 %v40, %v95
    %v97 = vpop.f32.mrb[0].mxu0
    %98 = vdwg.mxu0
    %v99 = vmax.f32 %v93, 0.0
    %v100 = vmax.f32 %v96, 0.0
    %v101 = vpack.c.bf16 %v100, %v99
    %v102 = vld [vmem:[%s3] sm:$0xf]
    %v103 = vld [vmem:[%s3 + $0x4] sm:$0xf]
    %v104 = vld [vmem:[%s3 + $0x8] sm:$0xf]
    %v105 = vld [vmem:[%s3 + $0xc] sm:$0xf]
    %v106 = vld [vmem:[%s3 + $0x10] sm:$0xf]
    %v107 = vld [vmem:[%s3 + $0x14] sm:$0xf]
    %v108 = vld [vmem:[%s3 + $0x18] sm:$0xf]
    %v109 = vld [vmem:[%s3 + $0x1c] sm:$0xf]
    %v110 = vld [vmem:[%s3 + $0x20] sm:$0xf]
    %v111 = vld [vmem:[%s3 + $0x24] sm:$0xf]
    %v112 = vld [vmem:[%s3 + $0x28] sm:$0xf]
    %v113 = vld [vmem:[%s3 + $0x2c] sm:$0xf]
    %v114 = vld [vmem:[%s3 + $0x30] sm:$0xf]
    %v115 = vld [vmem:[%s3 + $0x34] sm:$0xf]
    %v116 = vld [vmem:[%s3 + $0x38] sm:$0xf]
    %v117 = vld [vmem:[%s3 + $0x3c] sm:$0xf]
    %v118 = vld [vmem:[%s4] sm:$0x1]
    %v120 = vlaneseq
    %v121 = vshrl.u32 %v120, 7
    %v122 = vsub.s32 0, %v121
    %v123 = vrot.slane %v118, %v122
    %v141 = vunpack.c.l.b16 %v102
    %v142 = vunpack.c.l.b16 %v103
    %v143 = vunpack.c.l.b16 %v104
    %v144 = vunpack.c.l.b16 %v105
    %v145 = vunpack.c.l.b16 %v106
    %v146 = vunpack.c.l.b16 %v107
    %v147 = vunpack.c.l.b16 %v108
    %v148 = vunpack.c.l.b16 %v109
    %v149 = vunpack.c.l.b16 %v110
    %v150 = vunpack.c.l.b16 %v111
    %v151 = vunpack.c.l.b16 %v112
    %v152 = vunpack.c.l.b16 %v113
    %v153 = vunpack.c.l.b16 %v114
    %v154 = vunpack.c.l.b16 %v115
    %v155 = vunpack.c.l.b16 %v116
    %v156 = vunpack.c.l.b16 %v117
    %v157 = vpack.c.b16 %v142, %v141
    %v158 = vpack.c.b16 %v144, %v143
    %v159 = vpack.c.b16 %v146, %v145
    %v160 = vpack.c.b16 %v148, %v147
    %v161 = vpack.c.b16 %v150, %v149
    %v162 = vpack.c.b16 %v152, %v151
    %v163 = vpack.c.b16 %v154, %v153
    %v164 = vpack.c.b16 %v156, %v155
    %173 = vmatprep.subr.bf16.mxu0 0
    %174 = vmatpush1.bf16.msra.mxu0 %v157
    %175 = vmatprep.subr.bf16.mxu0 0
    %176 = vmatpush1.bf16.msra.mxu0 %v158
    %177 = vmatprep.subr.bf16.mxu0 0
    %178 = vmatpush1.bf16.msra.mxu0 %v159
    %179 = vmatprep.subr.bf16.mxu0 0
    %180 = vmatpush1.bf16.msra.mxu0 %v160
    %181 = vmatprep.subr.bf16.mxu0 0
    %182 = vmatpush1.bf16.msra.mxu0 %v161
    %183 = vmatprep.subr.bf16.mxu0 0
    %184 = vmatpush1.bf16.msra.mxu0 %v162
    %185 = vmatprep.subr.bf16.mxu0 0
    %186 = vmatpush1.bf16.msra.mxu0 %v163
    %187 = vmatprep.subr.bf16.mxu0 0
    %188 = vmatpush1.bf16.msra.mxu0 %v164
    %189 = vmatprep.subr.bf16.mxu0 0
    %190 = vmatpush1.bf16.msra.mxu0 0
    %191 = vmatprep.subr.bf16.mxu0 0
    %192 = vmatpush1.bf16.msra.mxu0 0
    %193 = vmatprep.subr.bf16.mxu0 0
    %194 = vmatpush1.bf16.msra.mxu0 0
    %195 = vmatprep.subr.bf16.mxu0 0
    %196 = vmatpush1.bf16.msra.mxu0 0
    %197 = vmatprep.subr.bf16.mxu0 0
    %198 = vmatpush1.bf16.msra.mxu0 0
    %199 = vmatprep.subr.bf16.mxu0 0
    %200 = vmatpush1.bf16.msra.mxu0 0
    %201 = vmatprep.subr.bf16.mxu0 0
    %202 = vmatpush1.bf16.msra.mxu0 0
    %203 = vmatprep.subr.bf16.mxu0 0
    %204 = vmatpush1.bf16.msra.mxu0 0
    %205 = vmatprep.mubr.bf16.mxu0 0
    %206 = vmatmul.mubr.bf16.gmra.mrb[0].mxu0 %v101
    %v207 = vpop.f32.mrb[0].mxu0
    %v208 = vadd.f32 %v123, %v207
    %v209 = vpop.f32.mrb[0].mxu0
    %v210 = vpop.f32.mrb[0].mxu0
    %v211 = vadd.f32 %v123, %v210
    %v212 = vpop.f32.mrb[0].mxu0
    %213 = vdwg.mxu0
    %v214 = vadd.f32 %v208, %v28
    %v215 = vadd.f32 %v211, %v29
    %v216 = vsel %vm54, %v214, 0.0
    %217 = vadd.xlane.f32.xlu0 %v216
    %v218 = vpop.xlane.xlu0 %217
    %v219 = vsel %vm54, %v215, 0.0
    %220 = vadd.xlane.f32.xlu0 %v219
    %v221 = vpop.xlane.xlu0 %220
    %v222 = vrcp.pop 32.0
    %v223 = vmul.f32 %v218, %v222
    %v224 = vmul.f32 %v221, %v222
    %v225 = vsub.f32 %v214, %v223
    %v226 = vsub.f32 %v215, %v224
    %v227 = vmul.f32 %v225, %v225
    %v228 = vmul.f32 %v226, %v226
    %v229 = vsel %vm54, %v227, 0.0
    %230 = vadd.xlane.f32.xlu0 %v229
    %v231 = vpop.xlane.xlu0 %230
    %v232 = vsel %vm54, %v228, 0.0
    %233 = vadd.xlane.f32.xlu0 %v232
    %v234 = vpop.xlane.xlu0 %233
    %v235 = vmul.f32 %v231, %v222
    %v236 = vmul.f32 %v234, %v222
    %v237 = vadd.f32 %v235, 1e-05
    %v238 = vadd.f32 %v236, 1e-05
    %v239 = vrsqrt.pop %v237
    %v240 = vrsqrt.pop %v238
    %v241 = vmul.f32 %v225, %v239
    %v242 = vmul.f32 %v226, %v240
    %v243 = vld [vmem:[%s5] sm:$0x1]
    %v245 = vlaneseq
    %v246 = vshrl.u32 %v245, 7
    %v247 = vsub.s32 0, %v246
    %v248 = vrot.slane %v243, %v247
    %v250 = vmul.f32 %v241, %v248
    %v251 = vmul.f32 %v242, %v248
    %v252 = vld [vmem:[%s6] sm:$0x1]
    %v254 = vlaneseq
    %v255 = vshrl.u32 %v254, 7
    %v256 = vsub.s32 0, %v255
    %v257 = vrot.slane %v252, %v256
    %v259 = vadd.f32 %v250, %v257
    %v260 = vadd.f32 %v251, %v257
    %261 = vst.msk [vmem:[#allocation2] sm:$0xff] %vm54, %v259
    %262 = vst.msk [vmem:[#allocation2 + $0x8] sm:$0xff] %vm54, %v260
    // Predicated region
    $region30: #{tpu_custom_call.1} parent=1 // pred_check
      _
    $region31: #{tpu_custom_call.1} parent=1 // pred_check_branch
      %264 = sbr.rel (0) target = $region33
    $region32: #{tpu_custom_call.1} parent=1 // pred_region
      %s266 = ssub.s32 256, 256
      %267 = vsyncadd [#allocation3], %s266
      %s268 = sshll.u32 [#allocation2], 4
      %s269 = int_to_ptr.vmem [resolvable:$true] %s268
      %274 = dma.vmem_to_hbm [thread:$0]  %s269, 256, %s7, [#allocation3], 128, 128, 8
    $region33: #{tpu_custom_call.1} parent=1 // pred_fallthru
      _
    // Predicated region
    $region34: #{tpu_custom_call.1} parent=1 // pred_check
      _
    $region35: #{tpu_custom_call.1} parent=1 // pred_check_branch
      %276 = sbr.rel (0) target = $region37
    $region36: #{tpu_custom_call.1} parent=1 // pred_region
      %277 = dma.done [#allocation3], 256
    $region37: #{tpu_custom_call.1} parent=1 // pred_fallthru
      _
    %278 = vsyncpa [#allocation3], 1

// kernel: tpu_custom_call.1
$region0: #{tpu_custom_call.1}
  #allocation0 [shape = 'u32[]', space=smem, size = 0x4, offset = 0x4, fixed_abs, tag = 'smem constant byte address 0x4 - core index']
  #allocation1 [shape = 'u32[144,128]{1,0:T(1,128)}', space=vmem, size = 0x12000, scoped, tag = 'internal scratch']
  %s0 = inlined_call_operand.vmem [shape: f32[16,32], index: 0, kind: input, shape index: {}]
  %s1 = inlined_call_operand.vmem [shape: bf16[32,128], index: 1, kind: input, shape index: {}]
  %s2 = inlined_call_operand.vmem [shape: f32[1,128], index: 2, kind: input, shape index: {}]
  %s3 = inlined_call_operand.vmem [shape: bf16[128,32], index: 3, kind: input, shape index: {}]
  %s4 = inlined_call_operand.vmem [shape: f32[1,32], index: 4, kind: input, shape index: {}]
  %s5 = inlined_call_operand.vmem [shape: f32[1,32], index: 5, kind: input, shape index: {}]
  %s6 = inlined_call_operand.vmem [shape: f32[1,32], index: 6, kind: input, shape index: {}]
  %s7 = inlined_call_operand.hbm [shape: f32[16,32], index: 7, kind: output, shape index: {}]
  %s8 = sld [smem:[#allocation0]]
  $region38: #{tpu_custom_call.1} parent=0
    _
  %s10 = ssub.s32 1, %s8
  %s11 = scalar_select 0, %s10, %s8
  $region1: #{tpu_custom_call.1} parent=0
    #allocation2 [shape = 'u8[8192]{0}', space=vmem, size = 0x2000, scoped, tag = 'output window, operand 0, single buffered']
    #allocation3 [shape = 's32[1]{0}', space=sflag, size = 0x4, scoped, tag = 'scoped memory for tpu_custom_call.1']
    %12 = vsyncpa [#allocation3], 0
    // Predicated region
    $region2: #{tpu_custom_call.1} parent=1 // pred_check
      _
    $region3: #{tpu_custom_call.1} parent=1 // pred_check_branch
      %14 = sbr.rel (0) target = $region5
    $region4: #{tpu_custom_call.1} parent=1 // pred_region
      _
    $region5: #{tpu_custom_call.1} parent=1 // pred_fallthru
      _
    // Predicated region
    $region6: #{tpu_custom_call.1} parent=1 // pred_check
      _
    $region7: #{tpu_custom_call.1} parent=1 // pred_check_branch
      %16 = sbr.rel (0) target = $region9
    $region8: #{tpu_custom_call.1} parent=1 // pred_region
      _
    $region9: #{tpu_custom_call.1} parent=1 // pred_fallthru
      _
    // Predicated region
    $region10: #{tpu_custom_call.1} parent=1 // pred_check
      _
    $region11: #{tpu_custom_call.1} parent=1 // pred_check_branch
      %18 = sbr.rel (0) target = $region13
    $region12: #{tpu_custom_call.1} parent=1 // pred_region
      _
    $region13: #{tpu_custom_call.1} parent=1 // pred_fallthru
      _
    // Predicated region
    $region14: #{tpu_custom_call.1} parent=1 // pred_check
      _
    $region15: #{tpu_custom_call.1} parent=1 // pred_check_branch
      %20 = sbr.rel (0) target = $region17
    $region16: #{tpu_custom_call.1} parent=1 // pred_region
      _
    $region17: #{tpu_custom_call.1} parent=1 // pred_fallthru
      _
    // Predicated region
    $region18: #{tpu_custom_call.1} parent=1 // pred_check
      _
    $region19: #{tpu_custom_call.1} parent=1 // pred_check_branch
      %22 = sbr.rel (0) target = $region21
    $region20: #{tpu_custom_call.1} parent=1 // pred_region
      _
    $region21: #{tpu_custom_call.1} parent=1 // pred_fallthru
      _
    // Predicated region
    $region22: #{tpu_custom_call.1} parent=1 // pred_check
      _
    $region23: #{tpu_custom_call.1} parent=1 // pred_check_branch
      %24 = sbr.rel (0) target = $region25
    $region24: #{tpu_custom_call.1} parent=1 // pred_region
      _
    $region25: #{tpu_custom_call.1} parent=1 // pred_fallthru
      _
    // Predicated region
    $region26: #{tpu_custom_call.1} parent=1 // pred_check
      _
    $region27: #{tpu_custom_call.1} parent=1 // pred_check_branch
      %26 = sbr.rel (0) target = $region29
    $region28: #{tpu_custom_call.1} parent=1 // pred_region
      _
    $region29: #{tpu_custom_call.1} parent=1 // pred_fallthru
      _
    %v28 = vld [vmem:[%s0] sm:$0xff]
    %v29 = vld [vmem:[%s0 + $0x8] sm:$0xff]
    %v30 = vpack.c.bf16 %v29, %v28
    %v31 = vld [vmem:[%s1] sm:$0xf]
    %v32 = vld [vmem:[%s1 + $0x4] sm:$0xf]
    %v33 = vld [vmem:[%s1 + $0x8] sm:$0xf]
    %v34 = vld [vmem:[%s1 + $0xc] sm:$0xf]
    %v35 = vld [vmem:[%s2] sm:$0x1]
    %v37 = vlaneseq
    %v38 = vshrl.u32 %v37, 7
    %v39 = vsub.s32 0, %v38
    %v40 = vrot.slane %v35, %v39
    %v46 = vunpack.c.l.b16 %v31
    %v47 = vunpack.c.l.b16 %v32
    %v48 = vunpack.c.l.b16 %v33
    %v49 = vunpack.c.l.b16 %v34
    %v50 = vpack.c.b16 %v47, %v46
    %v51 = vpack.c.b16 %v49, %v48
    %vm54 = vcmask 261120
    %v56 = vsel %vm54, %v30, 0
    %58 = vmatprep.subr.bf16.mxu0 0
    %59 = vmatpush1.bf16.msra.mxu0 %v50
    %60 = vmatprep.subr.bf16.mxu0 0
    %61 = vmatpush1.bf16.msra.mxu0 %v51
    %62 = vmatprep.subr.bf16.mxu0 0
    %63 = vmatpush1.bf16.msra.mxu0 0
    %64 = vmatprep.subr.bf16.mxu0 0
    %65 = vmatpush1.bf16.msra.mxu0 0
    %66 = vmatprep.subr.bf16.mxu0 0
    %67 = vmatpush1.bf16.msra.mxu0 0
    %68 = vmatprep.subr.bf16.mxu0 0
    %69 = vmatpush1.bf16.msra.mxu0 0
    %70 = vmatprep.subr.bf16.mxu0 0
    %71 = vmatpush1.bf16.msra.mxu0 0
    %72 = vmatprep.subr.bf16.mxu0 0
    %73 = vmatpush1.bf16.msra.mxu0 0
    %74 = vmatprep.subr.bf16.mxu0 0
    %75 = vmatpush1.bf16.msra.mxu0 0
    %76 = vmatprep.subr.bf16.mxu0 0
    %77 = vmatpush1.bf16.msra.mxu0 0
    %78 = vmatprep.subr.bf16.mxu0 0
    %79 = vmatpush1.bf16.msra.mxu0 0
    %80 = vmatprep.subr.bf16.mxu0 0
    %81 = vmatpush1.bf16.msra.mxu0 0
    %82 = vmatprep.subr.bf16.mxu0 0
    %83 = vmatpush1.bf16.msra.mxu0 0
    %84 = vmatprep.subr.bf16.mxu0 0
    %85 = vmatpush1.bf16.msra.mxu0 0
    %86 = vmatprep.subr.bf16.mxu0 0
    %87 = vmatpush1.bf16.msra.mxu0 0
    %88 = vmatprep.subr.bf16.mxu0 0
    %89 = vmatpush1.bf16.msra.mxu0 0
    %90 = vmatprep.mubr.bf16.mxu0 0
    %91 = vmatmul.mubr.bf16.gmra.mrb[0].mxu0 %v56
    %v92 = vpop.f32.mrb[0].mxu0
    %v93 = vadd.f32 %v40, %v92
    %v94 = vpop.f32.mrb[0].mxu0
    %v95 = vpop.f32.mrb[0].mxu0
    %v96 = vadd.f32 %v40, %v95
    %v97 = vpop.f32.mrb[0].mxu0
    %98 = vdwg.mxu0
    %v99 = vmax.f32 %v93, 0.0
    %v100 = vmax.f32 %v96, 0.0
    %v101 = vpack.c.bf16 %v100, %v99
    %v102 = vld [vmem:[%s3] sm:$0xf]
    %v103 = vld [vmem:[%s3 + $0x4] sm:$0xf]
    %v104 = vld [vmem:[%s3 + $0x8] sm:$0xf]
    %v105 = vld [vmem:[%s3 + $0xc] sm:$0xf]
    %v106 = vld [vmem:[%s3 + $0x10] sm:$0xf]
    %v107 = vld [vmem:[%s3 + $0x14] sm:$0xf]
    %v108 = vld [vmem:[%s3 + $0x18] sm:$0xf]
    %v109 = vld [vmem:[%s3 + $0x1c] sm:$0xf]
    %v110 = vld [vmem:[%s3 + $0x20] sm:$0xf]
    %v111 = vld [vmem:[%s3 + $0x24] sm:$0xf]
    %v112 = vld [vmem:[%s3 + $0x28] sm:$0xf]
    %v113 = vld [vmem:[%s3 + $0x2c] sm:$0xf]
    %v114 = vld [vmem:[%s3 + $0x30] sm:$0xf]
    %v115 = vld [vmem:[%s3 + $0x34] sm:$0xf]
    %v116 = vld [vmem:[%s3 + $0x38] sm:$0xf]
    %v117 = vld [vmem:[%s3 + $0x3c] sm:$0xf]
    %v118 = vld [vmem:[%s4] sm:$0x1]
    %v120 = vlaneseq
    %v121 = vshrl.u32 %v120, 7
    %v122 = vsub.s32 0, %v121
    %v123 = vrot.slane %v118, %v122
    %v141 = vunpack.c.l.b16 %v102
    %v142 = vunpack.c.l.b16 %v103
    %v143 = vunpack.c.l.b16 %v104
    %v144 = vunpack.c.l.b16 %v105
    %v145 = vunpack.c.l.b16 %v106
    %v146 = vunpack.c.l.b16 %v107
    %v147 = vunpack.c.l.b16 %v108
    %v148 = vunpack.c.l.b16 %v109
    %v149 = vunpack.c.l.b16 %v110
    %v150 = vunpack.c.l.b16 %v111
    %v151 = vunpack.c.l.b16 %v112
    %v152 = vunpack.c.l.b16 %v113
    %v153 = vunpack.c.l.b16 %v114
    %v154 = vunpack.c.l.b16 %v115
    %v155 = vunpack.c.l.b16 %v116
    %v156 = vunpack.c.l.b16 %v117
    %v157 = vpack.c.b16 %v142, %v141
    %v158 = vpack.c.b16 %v144, %v143
    %v159 = vpack.c.b16 %v146, %v145
    %v160 = vpack.c.b16 %v148, %v147
    %v161 = vpack.c.b16 %v150, %v149
    %v162 = vpack.c.b16 %v152, %v151
    %v163 = vpack.c.b16 %v154, %v153
    %v164 = vpack.c.b16 %v156, %v155
    %173 = vmatprep.subr.bf16.mxu0 0
    %174 = vmatpush1.bf16.msra.mxu0 %v157
    %175 = vmatprep.subr.bf16.mxu0 0
    %176 = vmatpush1.bf16.msra.mxu0 %v158
    %177 = vmatprep.subr.bf16.mxu0 0
    %178 = vmatpush1.bf16.msra.mxu0 %v159
    %179 = vmatprep.subr.bf16.mxu0 0
    %180 = vmatpush1.bf16.msra.mxu0 %v160
    %181 = vmatprep.subr.bf16.mxu0 0
    %182 = vmatpush1.bf16.msra.mxu0 %v161
    %183 = vmatprep.subr.bf16.mxu0 0
    %184 = vmatpush1.bf16.msra.mxu0 %v162
    %185 = vmatprep.subr.bf16.mxu0 0
    %186 = vmatpush1.bf16.msra.mxu0 %v163
    %187 = vmatprep.subr.bf16.mxu0 0
    %188 = vmatpush1.bf16.msra.mxu0 %v164
    %189 = vmatprep.subr.bf16.mxu0 0
    %190 = vmatpush1.bf16.msra.mxu0 0
    %191 = vmatprep.subr.bf16.mxu0 0
    %192 = vmatpush1.bf16.msra.mxu0 0
    %193 = vmatprep.subr.bf16.mxu0 0
    %194 = vmatpush1.bf16.msra.mxu0 0
    %195 = vmatprep.subr.bf16.mxu0 0
    %196 = vmatpush1.bf16.msra.mxu0 0
    %197 = vmatprep.subr.bf16.mxu0 0
    %198 = vmatpush1.bf16.msra.mxu0 0
    %199 = vmatprep.subr.bf16.mxu0 0
    %200 = vmatpush1.bf16.msra.mxu0 0
    %201 = vmatprep.subr.bf16.mxu0 0
    %202 = vmatpush1.bf16.msra.mxu0 0
    %203 = vmatprep.subr.bf16.mxu0 0
    %204 = vmatpush1.bf16.msra.mxu0 0
    %205 = vmatprep.mubr.bf16.mxu0 0
    %206 = vmatmul.mubr.bf16.gmra.mrb[0].mxu0 %v101
    %v207 = vpop.f32.mrb[0].mxu0
    %v208 = vadd.f32 %v123, %v207
    %v209 = vpop.f32.mrb[0].mxu0
    %v210 = vpop.f32.mrb[0].mxu0
    %v211 = vadd.f32 %v123, %v210
    %v212 = vpop.f32.mrb[0].mxu0
    %213 = vdwg.mxu0
    %v214 = vadd.f32 %v208, %v28
    %v215 = vadd.f32 %v211, %v29
    %v216 = vsel %vm54, %v214, 0.0
    %217 = vadd.xlane.f32.xlu0 %v216
    %v218 = vpop.xlane.xlu0 %217
    %v219 = vsel %vm54, %v215, 0.0
    %220 = vadd.xlane.f32.xlu0 %v219
    %v221 = vpop.xlane.xlu0 %220
    %v222 = vrcp.pop 32.0
    %v223 = vmul.f32 %v218, %v222
    %v224 = vmul.f32 %v221, %v222
    %v225 = vsub.f32 %v214, %v223
    %v226 = vsub.f32 %v215, %v224
    %v227 = vmul.f32 %v225, %v225
    %v228 = vmul.f32 %v226, %v226
    %v229 = vsel %vm54, %v227, 0.0
    %230 = vadd.xlane.f32.xlu0 %v229
    %v231 = vpop.xlane.xlu0 %230
    %v232 = vsel %vm54, %v228, 0.0
    %233 = vadd.xlane.f32.xlu0 %v232
    %v234 = vpop.xlane.xlu0 %233
    %v235 = vmul.f32 %v231, %v222
    %v236 = vmul.f32 %v234, %v222
    %v237 = vadd.f32 %v235, 1e-05
    %v238 = vadd.f32 %v236, 1e-05
    %v239 = vrsqrt.pop %v237
    %v240 = vrsqrt.pop %v238
    %v241 = vmul.f32 %v225, %v239
    %v242 = vmul.f32 %v226, %v240
    %v243 = vld [vmem:[%s5] sm:$0x1]
    %v245 = vlaneseq
    %v246 = vshrl.u32 %v245, 7
    %v247 = vsub.s32 0, %v246
    %v248 = vrot.slane %v243, %v247
    %v250 = vmul.f32 %v241, %v248
    %v251 = vmul.f32 %v242, %v248
    %v252 = vld [vmem:[%s6] sm:$0x1]
    %v254 = vlaneseq
    %v255 = vshrl.u32 %v254, 7
    %v256 = vsub.s32 0, %v255
    %v257 = vrot.slane %v252, %v256
    %v259 = vadd.f32 %v250, %v257
    %v260 = vadd.f32 %v251, %v257
    %261 = vst.msk [vmem:[#allocation2] sm:$0xff] %vm54, %v259
    %262 = vst.msk [vmem:[#allocation2 + $0x8] sm:$0xff] %vm54, %v260
    // Predicated region
    $region30: #{tpu_custom_call.1} parent=1 // pred_check
      _
    $region31: #{tpu_custom_call.1} parent=1 // pred_check_branch
      %264 = sbr.rel (0) target = $region33
    $region32: #{tpu_custom_call.1} parent=1 // pred_region
      %s266 = ssub.s32 256, 256
      %267 = vsyncadd [#allocation3], %s266
      %s268 = sshll.u32 [#allocation2], 4
      %s269 = int_to_ptr.vmem [resolvable:$true] %s268
      %274 = dma.vmem_to_hbm [thread:$0]  %s269, 256, %s7, [#allocation3], 128, 128, 8
    $region33: #{tpu_custom_call.1} parent=1 // pred_fallthru
      _
    // Predicated region
    $region34: #{tpu_custom_call.1} parent=1 // pred_check
      _
    $region35: #{tpu_custom_call.1} parent=1 // pred_check_branch
      %276 = sbr.rel (0) target = $region37
    $region36: #{tpu_custom_call.1} parent=1 // pred_region
      %277 = dma.done [#allocation3], 256
    $region37: #{tpu_custom_call.1} parent=1 // pred_fallthru
      _
    %278 = vsyncpa [#allocation3], 1

</llo_original>
